<compile_context>
chip_gen: v7x
topology: tpu7x:2x2x1
jax: 0.10.0
libtpu: 0.0.40
codegen_flags: <defaults>
</compile_context>

<pallas_src>
import functools

import jax
import jax.numpy as jnp
from jax.experimental import pallas as pl
from jax.experimental.pallas import tpu as pltpu


def _round_up(x, q):
    return ((x + q - 1) // q) * q


def _choose_tile(dim, preferred, quantum):
    """Largest multiple of `quantum` <= preferred that divides `dim`.

    Falls back to the full dim (always a legal BlockSpec block size)."""
    if dim <= preferred or dim % quantum != 0:
        return dim
    t = (min(preferred, dim) // quantum) * quantum
    while t >= quantum:
        if dim % t == 0:
            return t
        t -= quantum
    return dim


# ---------------------------------------------------------------------------
# Kernel A: build w_eff_t (in_f, out_f) = weight.T * (mla.T @ mlb.T/sr)
#                                         + la.T @ (lb.T/r)
# Grid-invariant w.r.t. M; runs once, tiled over (in_f, out_f).
# ---------------------------------------------------------------------------
def _weff_kernel(wT_ref, mlaT_ref, mlbT_ref, laT_ref, lbT_ref, o_ref):
    scale = jnp.dot(mlaT_ref[...], mlbT_ref[...],
                    preferred_element_type=jnp.float32)          # (tk, tn)
    low_rank = jnp.dot(laT_ref[...], lbT_ref[...],
                       preferred_element_type=jnp.float32)       # (tk, tn)
    o_ref[...] = wT_ref[...] * scale + low_rank


def _build_w_eff_t(wT, mlaT, mlbT_s, laT, lbT_s, *, tk, tn):
    in_f, out_f = wT.shape
    sr = mlaT.shape[1]
    r = laT.shape[1]
    return pl.pallas_call(
        _weff_kernel,
        out_shape=jax.ShapeDtypeStruct((in_f, out_f), jnp.float32),
        grid_spec=pltpu.PrefetchScalarGridSpec(
            num_scalar_prefetch=0,
            grid=(in_f // tk, out_f // tn),
            in_specs=[
                pl.BlockSpec((tk, tn), lambda i, j: (i, j)),   # weight.T tile
                pl.BlockSpec((tk, sr), lambda i, j: (i, 0)),   # multi_lora_a.T
                pl.BlockSpec((sr, tn), lambda i, j: (0, j)),   # multi_lora_b.T/sr
                pl.BlockSpec((tk, r), lambda i, j: (i, 0)),    # lora_a.T
                pl.BlockSpec((r, tn), lambda i, j: (0, j)),    # lora_b.T/r
            ],
            out_specs=pl.BlockSpec((tk, tn), lambda i, j: (i, j)),
        ),
        compiler_params=pltpu.CompilerParams(
            dimension_semantics=("parallel", "parallel"),
            vmem_limit_bytes=32 * 1024 * 1024),
    )(wT, mlaT, mlbT_s, laT, lbT_s)


# ---------------------------------------------------------------------------
# Kernel B: out = x @ w_eff_t + bias, tiled over (M, N, K) with f32 accumulator.
# ---------------------------------------------------------------------------
def _matmul_bias_kernel(x_ref, w_ref, b_ref, o_ref, acc_ref):
    k = pl.program_id(2)

    @pl.when(k == 0)
    def _():
        acc_ref[...] = jnp.zeros_like(acc_ref)

    acc_ref[...] += jnp.dot(x_ref[...], w_ref[...],
                            preferred_element_type=jnp.float32)

    @pl.when(k == pl.num_programs(2) - 1)
    def _():
        o_ref[...] = (acc_ref[...] + b_ref[...]).astype(o_ref.dtype)


def lora_linear_forward(x, weight, bias, lora_a, lora_b,
                        multi_lora_a, multi_lora_b,
                        rank, scaling_rank,
                        *, tile_m=256, tile_n=256, tile_k=512):
    """x: (batch, seq, in_features) float32. General branch (rank>0, sr>0)."""
    assert rank > 0 and scaling_rank > 0
    batch, seq, in_f = x.shape
    out_f = weight.shape[0]
    m = batch * seq

    # Adaptive, hardware-aligned tiles (fall back to full dims for small cases).
    tn = _choose_tile(out_f, tile_n, 128)      # lane dim of output: 128-aligned
    tk = _choose_tile(in_f, tile_k, 128)       # contraction tile
    tm = min(tile_m, _round_up(m, 8))          # sublane-aligned M tile
    m_pad = _round_up(m, tm)

    x2d = x.reshape(m, in_f).astype(jnp.float32)
    if m_pad != m:
        x2d = jnp.pad(x2d, ((0, m_pad - m), (0, 0)))
    bias2d = bias.reshape(1, out_f).astype(jnp.float32)

    # One-time, grid-invariant prep in the wrapper (skinny / cheap):
    #   fold 1/scaling_rank and 1/rank into the b-matrices, pre-transpose so the
    #   effective weight is produced directly in (in_f, out_f) layout.
    wT = weight.T.astype(jnp.float32)                              # (in, out)
    mlaT = multi_lora_a.T.astype(jnp.float32)                      # (in, sr)
    mlbT_s = (multi_lora_b.astype(jnp.float32) / scaling_rank).T   # (sr, out)
    laT = lora_a.T.astype(jnp.float32)                             # (in, r)
    lbT_s = (lora_b.astype(jnp.float32) / rank).T                  # (r, out)

    w_eff_t = _build_w_eff_t(wT, mlaT, mlbT_s, laT, lbT_s, tk=tk, tn=tn)

    out2d = pl.pallas_call(
        _matmul_bias_kernel,
        out_shape=jax.ShapeDtypeStruct((m_pad, out_f), jnp.float32),
        grid_spec=pltpu.PrefetchScalarGridSpec(
            num_scalar_prefetch=0,
            grid=(m_pad // tm, out_f // tn, in_f // tk),
            in_specs=[
                pl.BlockSpec((tm, tk), lambda i, j, k: (i, k)),   # x tile
                pl.BlockSpec((tk, tn), lambda i, j, k: (k, j)),   # w_eff_t tile
                pl.BlockSpec((1, tn), lambda i, j, k: (0, j)),    # bias tile
            ],
            out_specs=pl.BlockSpec((tm, tn), lambda i, j, k: (i, j)),
            scratch_shapes=[pltpu.VMEM((tm, tn), jnp.float32)],
        ),
        compiler_params=pltpu.CompilerParams(
            # M/N parallel (megacore / v7x dual-TC), K reduction arbitrary.
            dimension_semantics=("parallel", "parallel", "arbitrary"),
            # Explicit budget: safe on v5e/v6e (128 MiB) and v7x (64 MiB);
            # tile working set is only a few MiB so double-buffering fits.
            vmem_limit_bytes=32 * 1024 * 1024),
    )(x2d, w_eff_t, bias2d)

    return out2d[:m].reshape(batch, seq, out_f)


def _reference(x, weight, bias, lora_a, lora_b, multi_lora_a, multi_lora_b,
               rank, scaling_rank):
    w = weight * (multi_lora_b @ multi_lora_a) / scaling_rank
    w = w + (lora_b @ lora_a) / rank
    return jnp.einsum("bsi,oi->bso", x, w) + bias


if __name__ == "__main__":
    # Module config (general branch of forward): rank>0, scaling_rank>0,
    # init_scale < 0 so lora_b and multi_lora_b get random (non-trivial) init.
    batch, seq = 2, 8
    in_features, out_features = 32, 32
    rank, scaling_rank = 4, 2
    init_scale = -0.05

    key = jax.random.PRNGKey(0)
    k = iter(jax.random.split(key, 8))

    x = jax.random.normal(next(k), (batch, seq, in_features), dtype=jnp.float32)
    weight = jax.random.normal(next(k), (out_features, in_features),
                               dtype=jnp.float32) * 0.1
    bias = jax.random.normal(next(k), (out_features,), dtype=jnp.float32) * 0.1

    lora_a = jax.random.normal(next(k), (rank, in_features),
                               dtype=jnp.float32) * init_scale
    lora_b = jax.random.normal(next(k), (out_features, rank),
                               dtype=jnp.float32) * init_scale  # init_scale < 0 path
    multi_lora_a = (jnp.ones((scaling_rank, in_features), jnp.float32)
                    + jax.random.normal(next(k), (scaling_rank, in_features),
                                        dtype=jnp.float32) * init_scale)
    multi_lora_b = (jnp.ones((out_features, scaling_rank), jnp.float32)
                    + jax.random.normal(next(k), (out_features, scaling_rank),
                                        dtype=jnp.float32) * init_scale)

    out = lora_linear_forward(x, weight, bias, lora_a, lora_b,
                              multi_lora_a, multi_lora_b,
                              rank, scaling_rank)
    out = jax.block_until_ready(out)

    ref = _reference(x, weight, bias, lora_a, lora_b,
                     multi_lora_a, multi_lora_b, rank, scaling_rank)
    assert out.shape == (batch, seq, out_features)
    assert jnp.allclose(out, ref, atol=1e-4, rtol=1e-4), "mismatch vs reference"

    print("KERNEL_OK")
</pallas_src>

<mosaic_0001>
module attributes {stable_mosaic.version = 11 : i64} {
  func.func @_weff_kernel(%arg0: i32, %arg1: i32, %arg2: memref<32x32xf32, #tpu.memory_space<vmem>>, %arg3: memref<32x2xf32, #tpu.memory_space<vmem>>, %arg4: memref<2x32xf32, #tpu.memory_space<vmem>>, %arg5: memref<32x4xf32, #tpu.memory_space<vmem>>, %arg6: memref<4x32xf32, #tpu.memory_space<vmem>>, %arg7: memref<32x32xf32, #tpu.memory_space<vmem>>) attributes {dimension_semantics = [#tpu.dimension_semantics<parallel>, #tpu.dimension_semantics<parallel>], iteration_bounds = array<i64: 1, 1>, scalar_prefetch = 0 : i64, scratch_operands = 0 : i64, tpu.core_type = #tpu.core_type<tc>, window_params = [{transform_indices = @transform_0, window_bounds = array<i64: 32, 32>}, {transform_indices = @transform_1, window_bounds = array<i64: 32, 2>}, {transform_indices = @transform_2, window_bounds = array<i64: 2, 32>}, {transform_indices = @transform_3, window_bounds = array<i64: 32, 4>}, {transform_indices = @transform_4, window_bounds = array<i64: 4, 32>}, {transform_indices = @transform_5, window_bounds = array<i64: 32, 32>}]} {
    %c0 = arith.constant 0 : index
    %c0_0 = arith.constant 0 : index
    %0 = vector.load %arg3[%c0, %c0_0] : memref<32x2xf32, #tpu.memory_space<vmem>>, vector<32x2xf32>
    %c0_1 = arith.constant 0 : index
    %c0_2 = arith.constant 0 : index
    %1 = vector.load %arg4[%c0_1, %c0_2] : memref<2x32xf32, #tpu.memory_space<vmem>>, vector<2x32xf32>
    %cst = arith.constant dense<0.000000e+00> : vector<32x32xf32>
    %2 = tpu.matmul %0, %1, %cst {dimension_numbers = #tpu.dot_dimension_numbers<[1], [0], [0], [1], [0, 0, 1, 1], [], []>} : vector<32x2xf32>, vector<2x32xf32>, vector<32x32xf32> -> vector<32x32xf32>
    %c0_3 = arith.constant 0 : index
    %c0_4 = arith.constant 0 : index
    %3 = vector.load %arg5[%c0_3, %c0_4] : memref<32x4xf32, #tpu.memory_space<vmem>>, vector<32x4xf32>
    %c0_5 = arith.constant 0 : index
    %c0_6 = arith.constant 0 : index
    %4 = vector.load %arg6[%c0_5, %c0_6] : memref<4x32xf32, #tpu.memory_space<vmem>>, vector<4x32xf32>
    %cst_7 = arith.constant dense<0.000000e+00> : vector<32x32xf32>
    %5 = tpu.matmul %3, %4, %cst_7 {dimension_numbers = #tpu.dot_dimension_numbers<[1], [0], [0], [1], [0, 0, 1, 1], [], []>} : vector<32x4xf32>, vector<4x32xf32>, vector<32x32xf32> -> vector<32x32xf32>
    %c0_8 = arith.constant 0 : index
    %c0_9 = arith.constant 0 : index
    %6 = vector.load %arg2[%c0_8, %c0_9] : memref<32x32xf32, #tpu.memory_space<vmem>>, vector<32x32xf32>
    %7 = arith.mulf %6, %2 : vector<32x32xf32>
    %8 = arith.addf %7, %5 : vector<32x32xf32>
    %c0_10 = arith.constant 0 : index
    %c0_11 = arith.constant 0 : index
    %9 = vector.load %arg7[%c0_10, %c0_11] : memref<32x32xf32, #tpu.memory_space<vmem>>, vector<32x32xf32>
    tpu.vector_store %arg7[%c0_10, %c0_11], %8 {strides = array<i32>} : memref<32x32xf32, #tpu.memory_space<vmem>>, vector<32x32xf32>,
    return
  }
  func.func @transform_0(%arg0: i32, %arg1: i32) -> (i32, i32) {
    %c0_i32 = arith.constant 0 : i32
    return %arg0, %arg1 : i32, i32
  }
  func.func @transform_1(%arg0: i32, %arg1: i32) -> (i32, i32) {
    %c0_i32 = arith.constant 0 : i32
    %c0_i32_0 = arith.constant 0 : i32
    return %arg0, %c0_i32 : i32, i32
  }
  func.func @transform_2(%arg0: i32, %arg1: i32) -> (i32, i32) {
    %c0_i32 = arith.constant 0 : i32
    %c0_i32_0 = arith.constant 0 : i32
    return %c0_i32, %arg1 : i32, i32
  }
  func.func @transform_3(%arg0: i32, %arg1: i32) -> (i32, i32) {
    %c0_i32 = arith.constant 0 : i32
    %c0_i32_0 = arith.constant 0 : i32
    return %arg0, %c0_i32 : i32, i32
  }
  func.func @transform_4(%arg0: i32, %arg1: i32) -> (i32, i32) {
    %c0_i32 = arith.constant 0 : i32
    %c0_i32_0 = arith.constant 0 : i32
    return %c0_i32, %arg1 : i32, i32
  }
  func.func @transform_5(%arg0: i32, %arg1: i32) -> (i32, i32) {
    %c0_i32 = arith.constant 0 : i32
    return %arg0, %arg1 : i32, i32
  }
}

</mosaic_0001>

<llo_original>
// kernel: tpu_custom_call.1
$region0: #{tpu_custom_call.1}
  #allocation0 [shape = 'u32[]', space=smem, size = 0x4, offset = 0x4, fixed_abs, tag = 'smem constant byte address 0x4 - core index']
  #allocation1 [shape = 'u32[144,128]{1,0:T(1,128)}', space=vmem, size = 0x12000, scoped, tag = 'internal scratch']
  %s0 = inlined_call_operand.vmem [shape: f32[32,32], index: 0, kind: input, shape index: {}]
  %s1 = inlined_call_operand.vmem [shape: f32[32,2], index: 1, kind: input, shape index: {}]
  %s2 = inlined_call_operand.vmem [shape: f32[2,32], index: 2, kind: input, shape index: {}]
  %s3 = inlined_call_operand.vmem [shape: f32[32,4], index: 3, kind: input, shape index: {}]
  %s4 = inlined_call_operand.vmem [shape: f32[4,32], index: 4, kind: input, shape index: {}]
  %s5 = inlined_call_operand.hbm [shape: f32[32,32], index: 5, kind: output, shape index: {}]
  %s6 = sld [smem:[#allocation0]]
  $region30: #{tpu_custom_call.1} parent=0
    _
  %s8 = ssub.s32 1, %s6
  %s9 = scalar_select 0, %s8, %s6
  $region1: #{tpu_custom_call.1} parent=0
    #allocation2 [shape = 'u8[16384]{0}', space=vmem, size = 0x4000, scoped, tag = 'output window, operand 0, single buffered']
    #allocation3 [shape = 's32[1]{0}', space=sflag, size = 0x4, scoped, tag = 'scoped memory for tpu_custom_call.1']
    %10 = vsyncpa [#allocation3], 0
    // Predicated region
    $region2: #{tpu_custom_call.1} parent=1 // pred_check
      _
    $region3: #{tpu_custom_call.1} parent=1 // pred_check_branch
      %12 = sbr.rel (0) target = $region5
    $region4: #{tpu_custom_call.1} parent=1 // pred_region
      _
    $region5: #{tpu_custom_call.1} parent=1 // pred_fallthru
      _
    // Predicated region
    $region6: #{tpu_custom_call.1} parent=1 // pred_check
      _
    $region7: #{tpu_custom_call.1} parent=1 // pred_check_branch
      %14 = sbr.rel (0) target = $region9
    $region8: #{tpu_custom_call.1} parent=1 // pred_region
      _
    $region9: #{tpu_custom_call.1} parent=1 // pred_fallthru
      _
    // Predicated region
    $region10: #{tpu_custom_call.1} parent=1 // pred_check
      _
    $region11: #{tpu_custom_call.1} parent=1 // pred_check_branch
      %16 = sbr.rel (0) target = $region13
    $region12: #{tpu_custom_call.1} parent=1 // pred_region
      _
    $region13: #{tpu_custom_call.1} parent=1 // pred_fallthru
      _
    // Predicated region
    $region14: #{tpu_custom_call.1} parent=1 // pred_check
      _
    $region15: #{tpu_custom_call.1} parent=1 // pred_check_branch
      %18 = sbr.rel (0) target = $region17
    $region16: #{tpu_custom_call.1} parent=1 // pred_region
      _
    $region17: #{tpu_custom_call.1} parent=1 // pred_fallthru
      _
    // Predicated region
    $region18: #{tpu_custom_call.1} parent=1 // pred_check
      _
    $region19: #{tpu_custom_call.1} parent=1 // pred_check_branch
      %20 = sbr.rel (0) target = $region21
    $region20: #{tpu_custom_call.1} parent=1 // pred_region
      _
    $region21: #{tpu_custom_call.1} parent=1 // pred_fallthru
      _
    %v21 = vld [vmem:[%s1] sm:$0xff]
    %v22 = vld [vmem:[%s1 + $0x8] sm:$0xff]
    %v23 = vld [vmem:[%s1 + $0x10] sm:$0xff]
    %v24 = vld [vmem:[%s1 + $0x18] sm:$0xff]
    %v25 = vld [vmem:[%s2] sm:$0x3]
    %vm26 = vcmask 15360
    %v28 = vsel %vm26, %v21, 0
    %v31 = vsel %vm26, %v22, 0
    %v34 = vsel %vm26, %v23, 0
    %v37 = vsel %vm26, %v24, 0
    %vm39 = vcmask 1041408
    %v41 = vsel %vm39, %v25, 0
    %43 = vmatprep.subr.mxu0 0.0
    %44 = vmatpush1.msra.mxu0 %v41
    %45 = vmatprep.subr.mxu0 0.0
    %46 = vmatpush1.msra.mxu0 0.0
    %47 = vmatprep.subr.mxu0 0.0
    %48 = vmatpush1.msra.mxu0 0.0
    %49 = vmatprep.subr.mxu0 0.0
    %50 = vmatpush1.msra.mxu0 0.0
    %51 = vmatprep.subr.mxu0 0.0
    %52 = vmatpush1.msra.mxu0 0.0
    %53 = vmatprep.subr.mxu0 0.0
    %54 = vmatpush1.msra.mxu0 0.0
    %55 = vmatprep.subr.mxu0 0.0
    %56 = vmatpush1.msra.mxu0 0.0
    %57 = vmatprep.subr.mxu0 0.0
    %58 = vmatpush1.msra.mxu0 0.0
    %59 = vmatprep.subr.mxu0 0.0
    %60 = vmatpush1.msra.mxu0 0.0
    %61 = vmatprep.subr.mxu0 0.0
    %62 = vmatpush1.msra.mxu0 0.0
    %63 = vmatprep.subr.mxu0 0.0
    %64 = vmatpush1.msra.mxu0 0.0
    %65 = vmatprep.subr.mxu0 0.0
    %66 = vmatpush1.msra.mxu0 0.0
    %67 = vmatprep.subr.mxu0 0.0
    %68 = vmatpush1.msra.mxu0 0.0
    %69 = vmatprep.subr.mxu0 0.0
    %70 = vmatpush1.msra.mxu0 0.0
    %71 = vmatprep.subr.mxu0 0.0
    %72 = vmatpush1.msra.mxu0 0.0
    %73 = vmatprep.subr.mxu0 0.0
    %74 = vmatpush1.msra.mxu0 0.0
    %75 = vmatprep.subr.mxu0 0.0
    %76 = vmatpush1.msra.mxu0 0.0
    %77 = vmatprep.subr.mxu0 0.0
    %78 = vmatpush1.msra.mxu0 0.0
    %79 = vmatprep.subr.mxu0 0.0
    %80 = vmatpush1.msra.mxu0 0.0
    %81 = vmatprep.subr.mxu0 0.0
    %82 = vmatpush1.msra.mxu0 0.0
    %83 = vmatprep.subr.mxu0 0.0
    %84 = vmatpush1.msra.mxu0 0.0
    %85 = vmatprep.subr.mxu0 0.0
    %86 = vmatpush1.msra.mxu0 0.0
    %87 = vmatprep.subr.mxu0 0.0
    %88 = vmatpush1.msra.mxu0 0.0
    %89 = vmatprep.subr.mxu0 0.0
    %90 = vmatpush1.msra.mxu0 0.0
    %91 = vmatprep.subr.mxu0 0.0
    %92 = vmatpush1.msra.mxu0 0.0
    %93 = vmatprep.subr.mxu0 0.0
    %94 = vmatpush1.msra.mxu0 0.0
    %95 = vmatprep.subr.mxu0 0.0
    %96 = vmatpush1.msra.mxu0 0.0
    %97 = vmatprep.subr.mxu0 0.0
    %98 = vmatpush1.msra.mxu0 0.0
    %99 = vmatprep.subr.mxu0 0.0
    %100 = vmatpush1.msra.mxu0 0.0
    %101 = vmatprep.subr.mxu0 0.0
    %102 = vmatpush1.msra.mxu0 0.0
    %103 = vmatprep.subr.mxu0 0.0
    %104 = vmatpush1.msra.mxu0 0.0
    %105 = vmatprep.subr.mxu0 0.0
    %106 = vmatpush1.msra.mxu0 0.0
    %107 = vmatprep.mubr.f32.mxu0 0.0
    %108 = vmatmul.mubr.f32.gmra.mrb[0].mxu0 %v28
    %v109 = vpop.f32.mrb[0].mxu0
    %v110 = vadd.f32 0.0, %v109
    %v111 = vpop.f32.mrb[0].mxu0
    %112 = vmatprep.mubr.f32.mxu0 0.0
    %113 = vmatmul.mubr.f32.gmra.mrb[0].mxu0 %v31
    %v114 = vpop.f32.mrb[0].mxu0
    %v115 = vadd.f32 0.0, %v114
    %v116 = vpop.f32.mrb[0].mxu0
    %117 = vmatprep.mubr.f32.mxu0 0.0
    %118 = vmatmul.mubr.f32.gmra.mrb[0].mxu0 %v34
    %v119 = vpop.f32.mrb[0].mxu0
    %v120 = vadd.f32 0.0, %v119
    %v121 = vpop.f32.mrb[0].mxu0
    %122 = vmatprep.mubr.f32.mxu0 0.0
    %123 = vmatmul.mubr.f32.gmra.mrb[0].mxu0 %v37
    %v124 = vpop.f32.mrb[0].mxu0
    %v125 = vadd.f32 0.0, %v124
    %v126 = vpop.f32.mrb[0].mxu0
    %127 = vdwg.mxu0
    %v128 = vld [vmem:[%s3] sm:$0xff]
    %v129 = vld [vmem:[%s3 + $0x8] sm:$0xff]
    %v130 = vld [vmem:[%s3 + $0x10] sm:$0xff]
    %v131 = vld [vmem:[%s3 + $0x18] sm:$0xff]
    %v132 = vld [vmem:[%s4] sm:$0xf]
    %vm133 = vcmask 31744
    %v135 = vsel %vm133, %v128, 0
    %v138 = vsel %vm133, %v129, 0
    %v141 = vsel %vm133, %v130, 0
    %v144 = vsel %vm133, %v131, 0
    %vm146 = vcmask 1043456
    %v148 = vsel %vm146, %v132, 0
    %150 = vmatprep.subr.mxu0 0.0
    %151 = vmatpush1.msra.mxu0 %v148
    %152 = vmatprep.subr.mxu0 0.0
    %153 = vmatpush1.msra.mxu0 0.0
    %154 = vmatprep.subr.mxu0 0.0
    %155 = vmatpush1.msra.mxu0 0.0
    %156 = vmatprep.subr.mxu0 0.0
    %157 = vmatpush1.msra.mxu0 0.0
    %158 = vmatprep.subr.mxu0 0.0
    %159 = vmatpush1.msra.mxu0 0.0
    %160 = vmatprep.subr.mxu0 0.0
    %161 = vmatpush1.msra.mxu0 0.0
    %162 = vmatprep.subr.mxu0 0.0
    %163 = vmatpush1.msra.mxu0 0.0
    %164 = vmatprep.subr.mxu0 0.0
    %165 = vmatpush1.msra.mxu0 0.0
    %166 = vmatprep.subr.mxu0 0.0
    %167 = vmatpush1.msra.mxu0 0.0
    %168 = vmatprep.subr.mxu0 0.0
    %169 = vmatpush1.msra.mxu0 0.0
    %170 = vmatprep.subr.mxu0 0.0
    %171 = vmatpush1.msra.mxu0 0.0
    %172 = vmatprep.subr.mxu0 0.0
    %173 = vmatpush1.msra.mxu0 0.0
    %174 = vmatprep.subr.mxu0 0.0
    %175 = vmatpush1.msra.mxu0 0.0
    %176 = vmatprep.subr.mxu0 0.0
    %177 = vmatpush1.msra.mxu0 0.0
    %178 = vmatprep.subr.mxu0 0.0
    %179 = vmatpush1.msra.mxu0 0.0
    %180 = vmatprep.subr.mxu0 0.0
    %181 = vmatpush1.msra.mxu0 0.0
    %182 = vmatprep.subr.mxu0 0.0
    %183 = vmatpush1.msra.mxu0 0.0
    %184 = vmatprep.subr.mxu0 0.0
    %185 = vmatpush1.msra.mxu0 0.0
    %186 = vmatprep.subr.mxu0 0.0
    %187 = vmatpush1.msra.mxu0 0.0
    %188 = vmatprep.subr.mxu0 0.0
    %189 = vmatpush1.msra.mxu0 0.0
    %190 = vmatprep.subr.mxu0 0.0
    %191 = vmatpush1.msra.mxu0 0.0
    %192 = vmatprep.subr.mxu0 0.0
    %193 = vmatpush1.msra.mxu0 0.0
    %194 = vmatprep.subr.mxu0 0.0
    %195 = vmatpush1.msra.mxu0 0.0
    %196 = vmatprep.subr.mxu0 0.0
    %197 = vmatpush1.msra.mxu0 0.0
    %198 = vmatprep.subr.mxu0 0.0
    %199 = vmatpush1.msra.mxu0 0.0
    %200 = vmatprep.subr.mxu0 0.0
    %201 = vmatpush1.msra.mxu0 0.0
    %202 = vmatprep.subr.mxu0 0.0
    %203 = vmatpush1.msra.mxu0 0.0
    %204 = vmatprep.subr.mxu0 0.0
    %205 = vmatpush1.msra.mxu0 0.0
    %206 = vmatprep.subr.mxu0 0.0
    %207 = vmatpush1.msra.mxu0 0.0
    %208 = vmatprep.subr.mxu0 0.0
    %209 = vmatpush1.msra.mxu0 0.0
    %210 = vmatprep.subr.mxu0 0.0
    %211 = vmatpush1.msra.mxu0 0.0
    %212 = vmatprep.subr.mxu0 0.0
    %213 = vmatpush1.msra.mxu0 0.0
    %214 = vmatprep.mubr.f32.mxu0 0.0
    %215 = vmatmul.mubr.f32.gmra.mrb[0].mxu0 %v135
    %v216 = vpop.f32.mrb[0].mxu0
    %v217 = vadd.f32 0.0, %v216
    %v218 = vpop.f32.mrb[0].mxu0
    %219 = vmatprep.mubr.f32.mxu0 0.0
    %220 = vmatmul.mubr.f32.gmra.mrb[0].mxu0 %v138
    %v221 = vpop.f32.mrb[0].mxu0
    %v222 = vadd.f32 0.0, %v221
    %v223 = vpop.f32.mrb[0].mxu0
    %224 = vmatprep.mubr.f32.mxu0 0.0
    %225 = vmatmul.mubr.f32.gmra.mrb[0].mxu0 %v141
    %v226 = vpop.f32.mrb[0].mxu0
    %v227 = vadd.f32 0.0, %v226
    %v228 = vpop.f32.mrb[0].mxu0
    %229 = vmatprep.mubr.f32.mxu0 0.0
    %230 = vmatmul.mubr.f32.gmra.mrb[0].mxu0 %v144
    %v231 = vpop.f32.mrb[0].mxu0
    %v232 = vadd.f32 0.0, %v231
    %v233 = vpop.f32.mrb[0].mxu0
    %234 = vdwg.mxu0
    %v235 = vld [vmem:[%s0] sm:$0xff]
    %v236 = vld [vmem:[%s0 + $0x8] sm:$0xff]
    %v237 = vld [vmem:[%s0 + $0x10] sm:$0xff]
    %v238 = vld [vmem:[%s0 + $0x18] sm:$0xff]
    %v239 = vmul.f32 %v235, %v110
    %v240 = vmul.f32 %v236, %v115
    %v241 = vmul.f32 %v237, %v120
    %v242 = vmul.f32 %v238, %v125
    %v243 = vadd.f32 %v239, %v217
    %v244 = vadd.f32 %v240, %v222
    %v245 = vadd.f32 %v241, %v227
    %v246 = vadd.f32 %v242, %v232
    %vm247 = vcmask 261120
    %248 = vst.msk [vmem:[#allocation2] sm:$0xff] %vm247, %v243
    %249 = vst.msk [vmem:[#allocation2 + $0x8] sm:$0xff] %vm247, %v244
    %250 = vst.msk [vmem:[#allocation2 + $0x10] sm:$0xff] %vm247, %v245
    %251 = vst.msk [vmem:[#allocation2 + $0x18] sm:$0xff] %vm247, %v246
    // Predicated region
    $region22: #{tpu_custom_call.1} parent=1 // pred_check
      _
    $region23: #{tpu_custom_call.1} parent=1 // pred_check_branch
      %253 = sbr.rel (0) target = $region25
    $region24: #{tpu_custom_call.1} parent=1 // pred_region
      %s255 = ssub.s32 512, 512
      %256 = vsyncadd [#allocation3], %s255
      %s257 = sshll.u32 [#allocation2], 4
      %s258 = int_to_ptr.vmem [resolvable:$true] %s257
      %263 = dma.vmem_to_hbm [thread:$0]  %s258, 512, %s5, [#allocation3], 128, 128, 8
    $region25: #{tpu_custom_call.1} parent=1 // pred_fallthru
      _
    // Predicated region
    $region26: #{tpu_custom_call.1} parent=1 // pred_check
      _
    $region27: #{tpu_custom_call.1} parent=1 // pred_check_branch
      %265 = sbr.rel (0) target = $region29
    $region28: #{tpu_custom_call.1} parent=1 // pred_region
      %266 = dma.done [#allocation3], 512
    $region29: #{tpu_custom_call.1} parent=1 // pred_fallthru
      _
    %267 = vsyncpa [#allocation3], 1

</llo_original>
